<compile_context>
chip_gen: v7x
topology: tpu7x:2x2x1
jax: 0.10.0
libtpu: 0.0.40
codegen_flags: <defaults>
</compile_context>

<pallas_src>
import functools

import jax
import jax.numpy as jnp
from jax.experimental import pallas as pl
from jax.experimental.pallas import tpu as pltpu


def _actor_kernel(x_ref, g_ref,
                  w1_ref, b1_ref, w2_ref, b2_ref, w3_ref, b3_ref,
                  act_ref, argmax_ref):
    # Batch-on-lanes: x is (obs_dim, TB); weights are torch-style (out, in).
    x = x_ref[...].astype(jnp.float32)

    # ---- MLP hot path: W @ X on the MXU, tanh on the VPU (lane-dense) ----
    h1 = jnp.tanh(jnp.dot(w1_ref[...], x, preferred_element_type=jnp.float32)
                  + b1_ref[...])
    h2 = jnp.tanh(jnp.dot(w2_ref[...], h1, preferred_element_type=jnp.float32)
                  + b2_ref[...])
    logits = (jnp.dot(w3_ref[...], h2, preferred_element_type=jnp.float32)
              + b3_ref[...])                                   # (A, TB)

    A, TB = logits.shape
    idx = jax.lax.broadcasted_iota(jnp.int32, (A, TB), 0)

    # ---- argmax over action axis (sublanes), lowest index on ties ----
    mx = jnp.max(logits, axis=0, keepdims=True)
    amax = jnp.min(jnp.where(logits == mx, idx, A), axis=0, keepdims=True)

    # ---- Categorical sample via Gumbel-max (noise supplied per column) ----
    perturbed = logits + g_ref[...]
    pmx = jnp.max(perturbed, axis=0, keepdims=True)
    sample = jnp.min(jnp.where(perturbed == pmx, idx, A), axis=0, keepdims=True)

    # Lane-dense (1, TB) int32 stores.
    act_ref[...] = sample.astype(jnp.int32)
    argmax_ref[...] = amax.astype(jnp.int32)


@functools.partial(jax.jit, static_argnames=("block_b",))
def categorical_actor_forward(obs, w1, b1, w2, b2, w3, b3, key, *, block_b=512):
    """obs: (B, obs_dim); w*: torch-layout (out_dim, in_dim); b*: (out_dim,).

    Returns (act, max_prob_action), both int32 of shape (B,).
    """
    B, obs_dim = obs.shape
    act_num = w3.shape[0]

    # Lane-aligned batch tile (multiple of 128), padded batch.
    tb = min(block_b, pl.cdiv(B, 128) * 128)
    pb = pl.cdiv(B, tb) * tb
    grid = (pb // tb,)

    # Batch-on-lanes inputs: obs transposed to (obs_dim, PB); Gumbel noise (A, PB).
    obs_t = jnp.pad(obs.astype(jnp.float32), ((0, pb - B), (0, 0))).T
    gumbel = jax.random.gumbel(key, (act_num, pb), jnp.float32)

    w1f = w1.astype(jnp.float32)
    w2f = w2.astype(jnp.float32)
    w3f = w3.astype(jnp.float32)
    b1c = b1.astype(jnp.float32).reshape(-1, 1)
    b2c = b2.astype(jnp.float32).reshape(-1, 1)
    b3c = b3.astype(jnp.float32).reshape(-1, 1)

    col = lambda i: (0, i)      # batch-tiled arrays
    fixed = lambda i: (0, 0)    # weights/biases stay resident in VMEM

    act, amax = pl.pallas_call(
        _actor_kernel,
        out_shape=(jax.ShapeDtypeStruct((1, pb), jnp.int32),
                   jax.ShapeDtypeStruct((1, pb), jnp.int32)),
        grid=grid,
        in_specs=[
            pl.BlockSpec((obs_dim, tb), col),          # obs tile
            pl.BlockSpec((act_num, tb), col),          # gumbel noise tile
            pl.BlockSpec(w1f.shape, fixed),
            pl.BlockSpec(b1c.shape, fixed),
            pl.BlockSpec(w2f.shape, fixed),
            pl.BlockSpec(b2c.shape, fixed),
            pl.BlockSpec(w3f.shape, fixed),
            pl.BlockSpec(b3c.shape, fixed),
        ],
        out_specs=(pl.BlockSpec((1, tb), col),
                   pl.BlockSpec((1, tb), col)),
        compiler_params=pltpu.CompilerParams(
            dimension_semantics=("parallel",)),
    )(obs_t, gumbel, w1f, b1c, w2f, b2c, w3f, b3c)

    return act[0, :B], amax[0, :B]


def _init_linear(key, fan_in, fan_out):
    # Mimic torch.nn.Linear default init: U(-1/sqrt(fan_in), 1/sqrt(fan_in)).
    # Torch weight layout: (fan_out, fan_in).
    kw, kb = jax.random.split(key)
    bound = float(fan_in) ** -0.5
    w = jax.random.uniform(kw, (fan_out, fan_in), jnp.float32, -bound, bound)
    b = jax.random.uniform(kb, (fan_out,), jnp.float32, -bound, bound)
    return w, b


if __name__ == "__main__":
    # Small shapes consistent with the module: obs_dim=16, hidden_size=[32,32], act_num=8
    B, OBS_DIM, HIDDEN, ACT_NUM = 2, 16, 32, 8

    key = jax.random.PRNGKey(0)
    k_obs, k1, k2, k3, k_samp = jax.random.split(key, 5)

    obs = jax.random.normal(k_obs, (B, OBS_DIM), jnp.float32)
    w1, b1 = _init_linear(k1, OBS_DIM, HIDDEN)
    w2, b2 = _init_linear(k2, HIDDEN, HIDDEN)
    w3, b3 = _init_linear(k3, HIDDEN, ACT_NUM)

    act, max_prob_action = categorical_actor_forward(obs, w1, b1, w2, b2, w3, b3, k_samp)
    jax.block_until_ready((act, max_prob_action))

    # Pure-JAX reference for the deterministic part (argmax of logits).
    h1 = jnp.tanh(obs @ w1.T + b1)
    h2 = jnp.tanh(h1 @ w2.T + b2)
    logits_ref = h2 @ w3.T + b3
    amax_ref = jnp.argmax(logits_ref, axis=1).astype(jnp.int32)

    assert act.shape == (B,) and max_prob_action.shape == (B,)
    assert bool(jnp.all((act >= 0) & (act < ACT_NUM)))
    assert bool(jnp.all((max_prob_action >= 0) & (max_prob_action < ACT_NUM)))
    assert bool(jnp.all(max_prob_action == amax_ref))
    print("KERNEL_OK")
</pallas_src>

<mosaic_0001>
module attributes {stable_mosaic.version = 11 : i64} {
  func.func @_actor_kernel(%arg0: i32, %arg1: memref<16x128xf32, #tpu.memory_space<vmem>>, %arg2: memref<8x128xf32, #tpu.memory_space<vmem>>, %arg3: memref<32x16xf32, #tpu.memory_space<vmem>>, %arg4: memref<32x1xf32, #tpu.memory_space<vmem>>, %arg5: memref<32x32xf32, #tpu.memory_space<vmem>>, %arg6: memref<32x1xf32, #tpu.memory_space<vmem>>, %arg7: memref<8x32xf32, #tpu.memory_space<vmem>>, %arg8: memref<8x1xf32, #tpu.memory_space<vmem>>, %arg9: memref<1x128xi32, #tpu.memory_space<vmem>>, %arg10: memref<1x128xi32, #tpu.memory_space<vmem>>) attributes {dimension_semantics = [#tpu.dimension_semantics<parallel>], iteration_bounds = array<i64: 1>, scalar_prefetch = 0 : i64, scratch_operands = 0 : i64, tpu.core_type = #tpu.core_type<tc>, window_params = [{transform_indices = @transform_0, window_bounds = array<i64: 16, 128>}, {transform_indices = @transform_1, window_bounds = array<i64: 8, 128>}, {pipeline_mode = #tpu.pipeline_mode<synchronous>, transform_indices = @transform_2, window_bounds = array<i64: 32, 16>}, {pipeline_mode = #tpu.pipeline_mode<synchronous>, transform_indices = @transform_3, window_bounds = array<i64: 32, 1>}, {pipeline_mode = #tpu.pipeline_mode<synchronous>, transform_indices = @transform_4, window_bounds = array<i64: 32, 32>}, {pipeline_mode = #tpu.pipeline_mode<synchronous>, transform_indices = @transform_5, window_bounds = array<i64: 32, 1>}, {pipeline_mode = #tpu.pipeline_mode<synchronous>, transform_indices = @transform_6, window_bounds = array<i64: 8, 32>}, {pipeline_mode = #tpu.pipeline_mode<synchronous>, transform_indices = @transform_7, window_bounds = array<i64: 8, 1>}, {transform_indices = @transform_8, window_bounds = array<i64: 1, 128>}, {transform_indices = @transform_9, window_bounds = array<i64: 1, 128>}]} {
    %c0 = arith.constant 0 : index
    %c0_0 = arith.constant 0 : index
    %0 = vector.load %arg1[%c0, %c0_0] : memref<16x128xf32, #tpu.memory_space<vmem>>, vector<16x128xf32>
    %c0_1 = arith.constant 0 : index
    %c0_2 = arith.constant 0 : index
    %1 = vector.load %arg3[%c0_1, %c0_2] : memref<32x16xf32, #tpu.memory_space<vmem>>, vector<32x16xf32>
    %cst = arith.constant dense<0.000000e+00> : vector<32x128xf32>
    %2 = tpu.matmul %1, %0, %cst {dimension_numbers = #tpu.dot_dimension_numbers<[1], [0], [0], [1], [0, 0, 1, 1], [], []>} : vector<32x16xf32>, vector<16x128xf32>, vector<32x128xf32> -> vector<32x128xf32>
    %c0_3 = arith.constant 0 : index
    %c0_4 = arith.constant 0 : index
    %3 = vector.load %arg4[%c0_3, %c0_4] : memref<32x1xf32, #tpu.memory_space<vmem>>, vector<32x1xf32>
    %4 = vector.broadcast %3 : vector<32x1xf32> to vector<32x128xf32>
    %5 = arith.addf %2, %4 : vector<32x128xf32>
    %6 = math.tanh %5 : vector<32x128xf32>
    %c0_5 = arith.constant 0 : index
    %c0_6 = arith.constant 0 : index
    %7 = vector.load %arg5[%c0_5, %c0_6] : memref<32x32xf32, #tpu.memory_space<vmem>>, vector<32x32xf32>
    %cst_7 = arith.constant dense<0.000000e+00> : vector<32x128xf32>
    %8 = tpu.matmul %7, %6, %cst_7 {dimension_numbers = #tpu.dot_dimension_numbers<[1], [0], [0], [1], [0, 0, 1, 1], [], []>} : vector<32x32xf32>, vector<32x128xf32>, vector<32x128xf32> -> vector<32x128xf32>
    %c0_8 = arith.constant 0 : index
    %c0_9 = arith.constant 0 : index
    %9 = vector.load %arg6[%c0_8, %c0_9] : memref<32x1xf32, #tpu.memory_space<vmem>>, vector<32x1xf32>
    %10 = vector.broadcast %9 : vector<32x1xf32> to vector<32x128xf32>
    %11 = arith.addf %8, %10 : vector<32x128xf32>
    %12 = math.tanh %11 : vector<32x128xf32>
    %c0_10 = arith.constant 0 : index
    %c0_11 = arith.constant 0 : index
    %13 = vector.load %arg7[%c0_10, %c0_11] : memref<8x32xf32, #tpu.memory_space<vmem>>, vector<8x32xf32>
    %cst_12 = arith.constant dense<0.000000e+00> : vector<8x128xf32>
    %14 = tpu.matmul %13, %12, %cst_12 {dimension_numbers = #tpu.dot_dimension_numbers<[1], [0], [0], [1], [0, 0, 1, 1], [], []>} : vector<8x32xf32>, vector<32x128xf32>, vector<8x128xf32> -> vector<8x128xf32>
    %c0_13 = arith.constant 0 : index
    %c0_14 = arith.constant 0 : index
    %15 = vector.load %arg8[%c0_13, %c0_14] : memref<8x1xf32, #tpu.memory_space<vmem>>, vector<8x1xf32>
    %16 = vector.broadcast %15 : vector<8x1xf32> to vector<8x128xf32>
    %17 = arith.addf %14, %16 : vector<8x128xf32>
    %18 = tpu.iota {dimensions = array<i32: 0>} : vector<8x128xi32>
    %cst_15 = arith.constant dense<0xFF800000> : vector<128xf32>
    %19 = vector.multi_reduction <maximumf>, %17, %cst_15 [0] : vector<8x128xf32> to vector<128xf32>
    %20 = vector.shape_cast %19 : vector<128xf32> to vector<1x128xf32>
    %21 = vector.broadcast %20 : vector<1x128xf32> to vector<8x128xf32>
    %22 = arith.cmpf oeq, %17, %21 : vector<8x128xf32>
    %c8_i32 = arith.constant 8 : i32
    %23 = vector.broadcast %c8_i32 : i32 to vector<8x128xi32>
    %24 = arith.select %22, %18, %23 : vector<8x128xi1>, vector<8x128xi32>
    %cst_16 = arith.constant dense<2147483647> : vector<128xi32>
    %25 = vector.multi_reduction <minsi>, %24, %cst_16 [0] : vector<8x128xi32> to vector<128xi32>
    %26 = vector.shape_cast %25 : vector<128xi32> to vector<1x128xi32>
    %c0_17 = arith.constant 0 : index
    %c0_18 = arith.constant 0 : index
    %27 = vector.load %arg2[%c0_17, %c0_18] : memref<8x128xf32, #tpu.memory_space<vmem>>, vector<8x128xf32>
    %28 = arith.addf %17, %27 : vector<8x128xf32>
    %cst_19 = arith.constant dense<0xFF800000> : vector<128xf32>
    %29 = vector.multi_reduction <maximumf>, %28, %cst_19 [0] : vector<8x128xf32> to vector<128xf32>
    %30 = vector.shape_cast %29 : vector<128xf32> to vector<1x128xf32>
    %31 = vector.broadcast %30 : vector<1x128xf32> to vector<8x128xf32>
    %32 = arith.cmpf oeq, %28, %31 : vector<8x128xf32>
    %c8_i32_20 = arith.constant 8 : i32
    %33 = vector.broadcast %c8_i32_20 : i32 to vector<8x128xi32>
    %34 = arith.select %32, %18, %33 : vector<8x128xi1>, vector<8x128xi32>
    %cst_21 = arith.constant dense<2147483647> : vector<128xi32>
    %35 = vector.multi_reduction <minsi>, %34, %cst_21 [0] : vector<8x128xi32> to vector<128xi32>
    %36 = vector.shape_cast %35 : vector<128xi32> to vector<1x128xi32>
    %c0_22 = arith.constant 0 : index
    %c0_23 = arith.constant 0 : index
    %37 = vector.load %arg9[%c0_22, %c0_23] : memref<1x128xi32, #tpu.memory_space<vmem>>, vector<1x128xi32>
    tpu.vector_store %arg9[%c0_22, %c0_23], %36 {strides = array<i32>} : memref<1x128xi32, #tpu.memory_space<vmem>>, vector<1x128xi32>,
    %c0_24 = arith.constant 0 : index
    %c0_25 = arith.constant 0 : index
    %38 = vector.load %arg10[%c0_24, %c0_25] : memref<1x128xi32, #tpu.memory_space<vmem>>, vector<1x128xi32>
    tpu.vector_store %arg10[%c0_24, %c0_25], %26 {strides = array<i32>} : memref<1x128xi32, #tpu.memory_space<vmem>>, vector<1x128xi32>,
    return
  }
  func.func @transform_0(%arg0: i32) -> (i32, i32) {
    %c0_i32 = arith.constant 0 : i32
    %c0_i32_0 = arith.constant 0 : i32
    return %c0_i32, %arg0 : i32, i32
  }
  func.func @transform_1(%arg0: i32) -> (i32, i32) {
    %c0_i32 = arith.constant 0 : i32
    %c0_i32_0 = arith.constant 0 : i32
    return %c0_i32, %arg0 : i32, i32
  }
  func.func @transform_2(%arg0: i32) -> (i32, i32) {
    %c0_i32 = arith.constant 0 : i32
    %c0_i32_0 = arith.constant 0 : i32
    %c0_i32_1 = arith.constant 0 : i32
    return %c0_i32, %c0_i32_0 : i32, i32
  }
  func.func @transform_3(%arg0: i32) -> (i32, i32) {
    %c0_i32 = arith.constant 0 : i32
    %c0_i32_0 = arith.constant 0 : i32
    %c0_i32_1 = arith.constant 0 : i32
    return %c0_i32, %c0_i32_0 : i32, i32
  }
  func.func @transform_4(%arg0: i32) -> (i32, i32) {
    %c0_i32 = arith.constant 0 : i32
    %c0_i32_0 = arith.constant 0 : i32
    %c0_i32_1 = arith.constant 0 : i32
    return %c0_i32, %c0_i32_0 : i32, i32
  }
  func.func @transform_5(%arg0: i32) -> (i32, i32) {
    %c0_i32 = arith.constant 0 : i32
    %c0_i32_0 = arith.constant 0 : i32
    %c0_i32_1 = arith.constant 0 : i32
    return %c0_i32, %c0_i32_0 : i32, i32
  }
  func.func @transform_6(%arg0: i32) -> (i32, i32) {
    %c0_i32 = arith.constant 0 : i32
    %c0_i32_0 = arith.constant 0 : i32
    %c0_i32_1 = arith.constant 0 : i32
    return %c0_i32, %c0_i32_0 : i32, i32
  }
  func.func @transform_7(%arg0: i32) -> (i32, i32) {
    %c0_i32 = arith.constant 0 : i32
    %c0_i32_0 = arith.constant 0 : i32
    %c0_i32_1 = arith.constant 0 : i32
    return %c0_i32, %c0_i32_0 : i32, i32
  }
  func.func @transform_8(%arg0: i32) -> (i32, i32) {
    %c0_i32 = arith.constant 0 : i32
    %c0_i32_0 = arith.constant 0 : i32
    return %c0_i32, %arg0 : i32, i32
  }
  func.func @transform_9(%arg0: i32) -> (i32, i32) {
    %c0_i32 = arith.constant 0 : i32
    %c0_i32_0 = arith.constant 0 : i32
    return %c0_i32, %arg0 : i32, i32
  }
}

</mosaic_0001>

<llo_original>
// kernel: categorical_actor_forward.1
$region0: #{categorical_actor_forward.1}
  #allocation0 [shape = 'u32[]', space=smem, size = 0x4, offset = 0x4, fixed_abs, tag = 'smem constant byte address 0x4 - core index']
  #allocation1 [shape = 'u32[144,128]{1,0:T(1,128)}', space=vmem, size = 0x12000, scoped, tag = 'internal scratch']
  %s0 = inlined_call_operand.vmem [shape: f32[16,128], index: 0, kind: input, shape index: {}]
  %s1 = inlined_call_operand.vmem [shape: f32[8,128], index: 1, kind: input, shape index: {}]
  %s2 = inlined_call_operand.vmem [shape: f32[32,16], index: 2, kind: input, shape index: {}]
  %s3 = inlined_call_operand.vmem [shape: f32[32,1], index: 3, kind: input, shape index: {}]
  %s4 = inlined_call_operand.vmem [shape: f32[32,32], index: 4, kind: input, shape index: {}]
  %s5 = inlined_call_operand.vmem [shape: f32[32,1], index: 5, kind: input, shape index: {}]
  %s6 = inlined_call_operand.vmem [shape: f32[8,32], index: 6, kind: input, shape index: {}]
  %s7 = inlined_call_operand.vmem [shape: f32[8,1], index: 7, kind: input, shape index: {}]
  %s8 = inlined_call_operand.vmem [shape: s32[1,128], index: 8, kind: output, shape index: {0}]
  %s9 = inlined_call_operand.vmem [shape: s32[1,128], index: 9, kind: output, shape index: {1}]
  %10 = xla_tuple %s8, %s9
  %s11 = sld [smem:[#allocation0]]
  $region50: #{categorical_actor_forward.1} parent=0
    _
  %s13 = ssub.s32 1, %s11
  %s14 = scalar_select 0, %s13, %s11
  // Predicated region
  $region2: #{categorical_actor_forward.1} parent=0 // pred_check
    _
  $region3: #{categorical_actor_forward.1} parent=0 // pred_check_branch
    %16 = sbr.rel (0) target = $region5
  $region4: #{categorical_actor_forward.1} parent=0 // pred_region
    _
  $region5: #{categorical_actor_forward.1} parent=0 // pred_fallthru
    _
  // Predicated region
  $region6: #{categorical_actor_forward.1} parent=0 // pred_check
    _
  $region7: #{categorical_actor_forward.1} parent=0 // pred_check_branch
    %18 = sbr.rel (0) target = $region9
  $region8: #{categorical_actor_forward.1} parent=0 // pred_region
    _
  $region9: #{categorical_actor_forward.1} parent=0 // pred_fallthru
    _
  // Predicated region
  $region10: #{categorical_actor_forward.1} parent=0 // pred_check
    _
  $region11: #{categorical_actor_forward.1} parent=0 // pred_check_branch
    %20 = sbr.rel (0) target = $region13
  $region12: #{categorical_actor_forward.1} parent=0 // pred_region
    _
  $region13: #{categorical_actor_forward.1} parent=0 // pred_fallthru
    _
  // Predicated region
  $region14: #{categorical_actor_forward.1} parent=0 // pred_check
    _
  $region15: #{categorical_actor_forward.1} parent=0 // pred_check_branch
    %22 = sbr.rel (0) target = $region17
  $region16: #{categorical_actor_forward.1} parent=0 // pred_region
    _
  $region17: #{categorical_actor_forward.1} parent=0 // pred_fallthru
    _
  // Predicated region
  $region18: #{categorical_actor_forward.1} parent=0 // pred_check
    _
  $region19: #{categorical_actor_forward.1} parent=0 // pred_check_branch
    %24 = sbr.rel (0) target = $region21
  $region20: #{categorical_actor_forward.1} parent=0 // pred_region
    _
  $region21: #{categorical_actor_forward.1} parent=0 // pred_fallthru
    _
  // Predicated region
  $region22: #{categorical_actor_forward.1} parent=0 // pred_check
    _
  $region23: #{categorical_actor_forward.1} parent=0 // pred_check_branch
    %26 = sbr.rel (0) target = $region25
  $region24: #{categorical_actor_forward.1} parent=0 // pred_region
    _
  $region25: #{categorical_actor_forward.1} parent=0 // pred_fallthru
    _
  // Predicated region
  $region26: #{categorical_actor_forward.1} parent=0 // pred_check
    _
  $region27: #{categorical_actor_forward.1} parent=0 // pred_check_branch
    %28 = sbr.rel (0) target = $region29
  $region28: #{categorical_actor_forward.1} parent=0 // pred_region
    _
  $region29: #{categorical_actor_forward.1} parent=0 // pred_fallthru
    _
  // Predicated region
  $region30: #{categorical_actor_forward.1} parent=0 // pred_check
    _
  $region31: #{categorical_actor_forward.1} parent=0 // pred_check_branch
    %30 = sbr.rel (0) target = $region33
  $region32: #{categorical_actor_forward.1} parent=0 // pred_region
    _
  $region33: #{categorical_actor_forward.1} parent=0 // pred_fallthru
    _
  %v31 = vld [vmem:[%s0] sm:$0xff]
  %v32 = vld [vmem:[%s0 + $0x8] sm:$0xff]
  %v33 = vld [vmem:[%s2] sm:$0xff]
  %v34 = vld [vmem:[%s2 + $0x8] sm:$0xff]
  %v35 = vld [vmem:[%s2 + $0x10] sm:$0xff]
  %v36 = vld [vmem:[%s2 + $0x18] sm:$0xff]
  %v37 = vld [vmem:[%s3] sm:$0xff]
  %v38 = vld [vmem:[%s3 + $0x8] sm:$0xff]
  %v39 = vld [vmem:[%s3 + $0x10] sm:$0xff]
  %v40 = vld [vmem:[%s3 + $0x18] sm:$0xff]
  %42 = vset.pattern.permute.xlu0 0
  %43 = vperm.xlu0 %42, %v37
  %v44 = vpop.permute.xlu0 %43
  %47 = vset.pattern.permute.xlu0 0
  %48 = vperm.xlu0 %47, %v38
  %v49 = vpop.permute.xlu0 %48
  %52 = vset.pattern.permute.xlu0 0
  %53 = vperm.xlu0 %52, %v39
  %v54 = vpop.permute.xlu0 %53
  %57 = vset.pattern.permute.xlu0 0
  %58 = vperm.xlu0 %57, %v40
  %v59 = vpop.permute.xlu0 %58
  %vm61 = vcmask 130048
  %v63 = vsel %vm61, %v33, 0
  %v66 = vsel %vm61, %v34, 0
  %v69 = vsel %vm61, %v35, 0
  %v72 = vsel %vm61, %v36, 0
  %74 = vmatprep.subr.mxu0 0.0
  %75 = vmatpush1.msra.mxu0 %v31
  %76 = vmatprep.subr.mxu0 0.0
  %77 = vmatpush1.msra.mxu0 %v32
  %78 = vmatprep.subr.mxu0 0.0
  %79 = vmatpush1.msra.mxu0 0.0
  %80 = vmatprep.subr.mxu0 0.0
  %81 = vmatpush1.msra.mxu0 0.0
  %82 = vmatprep.subr.mxu0 0.0
  %83 = vmatpush1.msra.mxu0 0.0
  %84 = vmatprep.subr.mxu0 0.0
  %85 = vmatpush1.msra.mxu0 0.0
  %86 = vmatprep.subr.mxu0 0.0
  %87 = vmatpush1.msra.mxu0 0.0
  %88 = vmatprep.subr.mxu0 0.0
  %89 = vmatpush1.msra.mxu0 0.0
  %90 = vmatprep.subr.mxu0 0.0
  %91 = vmatpush1.msra.mxu0 0.0
  %92 = vmatprep.subr.mxu0 0.0
  %93 = vmatpush1.msra.mxu0 0.0
  %94 = vmatprep.subr.mxu0 0.0
  %95 = vmatpush1.msra.mxu0 0.0
  %96 = vmatprep.subr.mxu0 0.0
  %97 = vmatpush1.msra.mxu0 0.0
  %98 = vmatprep.subr.mxu0 0.0
  %99 = vmatpush1.msra.mxu0 0.0
  %100 = vmatprep.subr.mxu0 0.0
  %101 = vmatpush1.msra.mxu0 0.0
  %102 = vmatprep.subr.mxu0 0.0
  %103 = vmatpush1.msra.mxu0 0.0
  %104 = vmatprep.subr.mxu0 0.0
  %105 = vmatpush1.msra.mxu0 0.0
  %106 = vmatprep.subr.mxu0 0.0
  %107 = vmatpush1.msra.mxu0 0.0
  %108 = vmatprep.subr.mxu0 0.0
  %109 = vmatpush1.msra.mxu0 0.0
  %110 = vmatprep.subr.mxu0 0.0
  %111 = vmatpush1.msra.mxu0 0.0
  %112 = vmatprep.subr.mxu0 0.0
  %113 = vmatpush1.msra.mxu0 0.0
  %114 = vmatprep.subr.mxu0 0.0
  %115 = vmatpush1.msra.mxu0 0.0
  %116 = vmatprep.subr.mxu0 0.0
  %117 = vmatpush1.msra.mxu0 0.0
  %118 = vmatprep.subr.mxu0 0.0
  %119 = vmatpush1.msra.mxu0 0.0
  %120 = vmatprep.subr.mxu0 0.0
  %121 = vmatpush1.msra.mxu0 0.0
  %122 = vmatprep.subr.mxu0 0.0
  %123 = vmatpush1.msra.mxu0 0.0
  %124 = vmatprep.subr.mxu0 0.0
  %125 = vmatpush1.msra.mxu0 0.0
  %126 = vmatprep.subr.mxu0 0.0
  %127 = vmatpush1.msra.mxu0 0.0
  %128 = vmatprep.subr.mxu0 0.0
  %129 = vmatpush1.msra.mxu0 0.0
  %130 = vmatprep.subr.mxu0 0.0
  %131 = vmatpush1.msra.mxu0 0.0
  %132 = vmatprep.subr.mxu0 0.0
  %133 = vmatpush1.msra.mxu0 0.0
  %134 = vmatprep.subr.mxu0 0.0
  %135 = vmatpush1.msra.mxu0 0.0
  %136 = vmatprep.subr.mxu0 0.0
  %137 = vmatpush1.msra.mxu0 0.0
  %138 = vmatprep.mubr.f32.mxu0 0.0
  %139 = vmatmul.mubr.f32.gmra.mrb[0].mxu0 %v63
  %v140 = vpop.f32.mrb[0].mxu0
  %v141 = vadd.f32 %v44, %v140
  %v142 = vpop.f32.mrb[0].mxu0
  %143 = vmatprep.mubr.f32.mxu0 0.0
  %144 = vmatmul.mubr.f32.gmra.mrb[0].mxu0 %v66
  %v145 = vpop.f32.mrb[0].mxu0
  %v146 = vadd.f32 %v49, %v145
  %v147 = vpop.f32.mrb[0].mxu0
  %148 = vmatprep.mubr.f32.mxu0 0.0
  %149 = vmatmul.mubr.f32.gmra.mrb[0].mxu0 %v69
  %v150 = vpop.f32.mrb[0].mxu0
  %v151 = vadd.f32 %v54, %v150
  %v152 = vpop.f32.mrb[0].mxu0
  %153 = vmatprep.mubr.f32.mxu0 0.0
  %154 = vmatmul.mubr.f32.gmra.mrb[0].mxu0 %v72
  %v155 = vpop.f32.mrb[0].mxu0
  %v156 = vadd.f32 %v59, %v155
  %v157 = vpop.f32.mrb[0].mxu0
  %158 = vdwg.mxu0
  %v159 = vtanh.pop %v141
  %v160 = vtanh.pop %v146
  %v161 = vtanh.pop %v151
  %v162 = vtanh.pop %v156
  %v163 = vld [vmem:[%s4] sm:$0xff]
  %v164 = vld [vmem:[%s4 + $0x8] sm:$0xff]
  %v165 = vld [vmem:[%s4 + $0x10] sm:$0xff]
  %v166 = vld [vmem:[%s4 + $0x18] sm:$0xff]
  %v167 = vld [vmem:[%s5] sm:$0xff]
  %v168 = vld [vmem:[%s5 + $0x8] sm:$0xff]
  %v169 = vld [vmem:[%s5 + $0x10] sm:$0xff]
  %v170 = vld [vmem:[%s5 + $0x18] sm:$0xff]
  %172 = vset.pattern.permute.xlu0 0
  %173 = vperm.xlu0 %172, %v167
  %v174 = vpop.permute.xlu0 %173
  %177 = vset.pattern.permute.xlu0 0
  %178 = vperm.xlu0 %177, %v168
  %v179 = vpop.permute.xlu0 %178
  %182 = vset.pattern.permute.xlu0 0
  %183 = vperm.xlu0 %182, %v169
  %v184 = vpop.permute.xlu0 %183
  %187 = vset.pattern.permute.xlu0 0
  %188 = vperm.xlu0 %187, %v170
  %v189 = vpop.permute.xlu0 %188
  %vm191 = vcmask 261120
  %v193 = vsel %vm191, %v163, 0
  %v196 = vsel %vm191, %v164, 0
  %v199 = vsel %vm191, %v165, 0
  %v202 = vsel %vm191, %v166, 0
  %204 = vmatprep.subr.mxu0 0.0
  %205 = vmatpush1.msra.mxu0 %v159
  %206 = vmatprep.subr.mxu0 0.0
  %207 = vmatpush1.msra.mxu0 %v160
  %208 = vmatprep.subr.mxu0 0.0
  %209 = vmatpush1.msra.mxu0 %v161
  %210 = vmatprep.subr.mxu0 0.0
  %211 = vmatpush1.msra.mxu0 %v162
  %212 = vmatprep.subr.mxu0 0.0
  %213 = vmatpush1.msra.mxu0 0.0
  %214 = vmatprep.subr.mxu0 0.0
  %215 = vmatpush1.msra.mxu0 0.0
  %216 = vmatprep.subr.mxu0 0.0
  %217 = vmatpush1.msra.mxu0 0.0
  %218 = vmatprep.subr.mxu0 0.0
  %219 = vmatpush1.msra.mxu0 0.0
  %220 = vmatprep.subr.mxu0 0.0
  %221 = vmatpush1.msra.mxu0 0.0
  %222 = vmatprep.subr.mxu0 0.0
  %223 = vmatpush1.msra.mxu0 0.0
  %224 = vmatprep.subr.mxu0 0.0
  %225 = vmatpush1.msra.mxu0 0.0
  %226 = vmatprep.subr.mxu0 0.0
  %227 = vmatpush1.msra.mxu0 0.0
  %228 = vmatprep.subr.mxu0 0.0
  %229 = vmatpush1.msra.mxu0 0.0
  %230 = vmatprep.subr.mxu0 0.0
  %231 = vmatpush1.msra.mxu0 0.0
  %232 = vmatprep.subr.mxu0 0.0
  %233 = vmatpush1.msra.mxu0 0.0
  %234 = vmatprep.subr.mxu0 0.0
  %235 = vmatpush1.msra.mxu0 0.0
  %236 = vmatprep.subr.mxu0 0.0
  %237 = vmatpush1.msra.mxu0 0.0
  %238 = vmatprep.subr.mxu0 0.0
  %239 = vmatpush1.msra.mxu0 0.0
  %240 = vmatprep.subr.mxu0 0.0
  %241 = vmatpush1.msra.mxu0 0.0
  %242 = vmatprep.subr.mxu0 0.0
  %243 = vmatpush1.msra.mxu0 0.0
  %244 = vmatprep.subr.mxu0 0.0
  %245 = vmatpush1.msra.mxu0 0.0
  %246 = vmatprep.subr.mxu0 0.0
  %247 = vmatpush1.msra.mxu0 0.0
  %248 = vmatprep.subr.mxu0 0.0
  %249 = vmatpush1.msra.mxu0 0.0
  %250 = vmatprep.subr.mxu0 0.0
  %251 = vmatpush1.msra.mxu0 0.0
  %252 = vmatprep.subr.mxu0 0.0
  %253 = vmatpush1.msra.mxu0 0.0
  %254 = vmatprep.subr.mxu0 0.0
  %255 = vmatpush1.msra.mxu0 0.0
  %256 = vmatprep.subr.mxu0 0.0
  %257 = vmatpush1.msra.mxu0 0.0
  %258 = vmatprep.subr.mxu0 0.0
  %259 = vmatpush1.msra.mxu0 0.0
  %260 = vmatprep.subr.mxu0 0.0
  %261 = vmatpush1.msra.mxu0 0.0
  %262 = vmatprep.subr.mxu0 0.0
  %263 = vmatpush1.msra.mxu0 0.0
  %264 = vmatprep.subr.mxu0 0.0
  %265 = vmatpush1.msra.mxu0 0.0
  %266 = vmatprep.subr.mxu0 0.0
  %267 = vmatpush1.msra.mxu0 0.0
  %268 = vmatprep.mubr.f32.mxu0 0.0
  %269 = vmatmul.mubr.f32.gmra.mrb[0].mxu0 %v193
  %v270 = vpop.f32.mrb[0].mxu0
  %v271 = vadd.f32 %v174, %v270
  %v272 = vpop.f32.mrb[0].mxu0
  %273 = vmatprep.mubr.f32.mxu0 0.0
  %274 = vmatmul.mubr.f32.gmra.mrb[0].mxu0 %v196
  %v275 = vpop.f32.mrb[0].mxu0
  %v276 = vadd.f32 %v179, %v275
  %v277 = vpop.f32.mrb[0].mxu0
  %278 = vmatprep.mubr.f32.mxu0 0.0
  %279 = vmatmul.mubr.f32.gmra.mrb[0].mxu0 %v199
  %v280 = vpop.f32.mrb[0].mxu0
  %v281 = vadd.f32 %v184, %v280
  %v282 = vpop.f32.mrb[0].mxu0
  %283 = vmatprep.mubr.f32.mxu0 0.0
  %284 = vmatmul.mubr.f32.gmra.mrb[0].mxu0 %v202
  %v285 = vpop.f32.mrb[0].mxu0
  %v286 = vadd.f32 %v189, %v285
  %v287 = vpop.f32.mrb[0].mxu0
  %288 = vdwg.mxu0
  %v289 = vtanh.pop %v271
  %v290 = vtanh.pop %v276
  %v291 = vtanh.pop %v281
  %v292 = vtanh.pop %v286
  %v293 = vld [vmem:[%s6] sm:$0xff]
  %v294 = vld [vmem:[%s7] sm:$0xff]
  %296 = vset.pattern.permute.xlu0 0
  %297 = vperm.xlu0 %296, %v294
  %v298 = vpop.permute.xlu0 %297
  %v301 = vsel %vm191, %v293, 0
  %303 = vmatprep.subr.mxu0 0.0
  %304 = vmatpush1.msra.mxu0 %v289
  %305 = vmatprep.subr.mxu0 0.0
  %306 = vmatpush1.msra.mxu0 %v290
  %307 = vmatprep.subr.mxu0 0.0
  %308 = vmatpush1.msra.mxu0 %v291
  %309 = vmatprep.subr.mxu0 0.0
  %310 = vmatpush1.msra.mxu0 %v292
  %311 = vmatprep.subr.mxu0 0.0
  %312 = vmatpush1.msra.mxu0 0.0
  %313 = vmatprep.subr.mxu0 0.0
  %314 = vmatpush1.msra.mxu0 0.0
  %315 = vmatprep.subr.mxu0 0.0
  %316 = vmatpush1.msra.mxu0 0.0
  %317 = vmatprep.subr.mxu0 0.0
  %318 = vmatpush1.msra.mxu0 0.0
  %319 = vmatprep.subr.mxu0 0.0
  %320 = vmatpush1.msra.mxu0 0.0
  %321 = vmatprep.subr.mxu0 0.0
  %322 = vmatpush1.msra.mxu0 0.0
  %323 = vmatprep.subr.mxu0 0.0
  %324 = vmatpush1.msra.mxu0 0.0
  %325 = vmatprep.subr.mxu0 0.0
  %326 = vmatpush1.msra.mxu0 0.0
  %327 = vmatprep.subr.mxu0 0.0
  %328 = vmatpush1.msra.mxu0 0.0
  %329 = vmatprep.subr.mxu0 0.0
  %330 = vmatpush1.msra.mxu0 0.0
  %331 = vmatprep.subr.mxu0 0.0
  %332 = vmatpush1.msra.mxu0 0.0
  %333 = vmatprep.subr.mxu0 0.0
  %334 = vmatpush1.msra.mxu0 0.0
  %335 = vmatprep.subr.mxu0 0.0
  %336 = vmatpush1.msra.mxu0 0.0
  %337 = vmatprep.subr.mxu0 0.0
  %338 = vmatpush1.msra.mxu0 0.0
  %339 = vmatprep.subr.mxu0 0.0
  %340 = vmatpush1.msra.mxu0 0.0
  %341 = vmatprep.subr.mxu0 0.0
  %342 = vmatpush1.msra.mxu0 0.0
  %343 = vmatprep.subr.mxu0 0.0
  %344 = vmatpush1.msra.mxu0 0.0
  %345 = vmatprep.subr.mxu0 0.0
  %346 = vmatpush1.msra.mxu0 0.0
  %347 = vmatprep.subr.mxu0 0.0
  %348 = vmatpush1.msra.mxu0 0.0
  %349 = vmatprep.subr.mxu0 0.0
  %350 = vmatpush1.msra.mxu0 0.0
  %351 = vmatprep.subr.mxu0 0.0
  %352 = vmatpush1.msra.mxu0 0.0
  %353 = vmatprep.subr.mxu0 0.0
  %354 = vmatpush1.msra.mxu0 0.0
  %355 = vmatprep.subr.mxu0 0.0
  %356 = vmatpush1.msra.mxu0 0.0
  %357 = vmatprep.subr.mxu0 0.0
  %358 = vmatpush1.msra.mxu0 0.0
  %359 = vmatprep.subr.mxu0 0.0
  %360 = vmatpush1.msra.mxu0 0.0
  %361 = vmatprep.subr.mxu0 0.0
  %362 = vmatpush1.msra.mxu0 0.0
  %363 = vmatprep.subr.mxu0 0.0
  %364 = vmatpush1.msra.mxu0 0.0
  %365 = vmatprep.subr.mxu0 0.0
  %366 = vmatpush1.msra.mxu0 0.0
  %367 = vmatprep.mubr.f32.mxu0 0.0
  %368 = vmatmul.mubr.f32.gmra.mrb[0].mxu0 %v301
  %v369 = vpop.f32.mrb[0].mxu0
  %v370 = vadd.f32 %v298, %v369
  %v371 = vpop.f32.mrb[0].mxu0
  %372 = vdwg.mxu0
  %v373 = vlaneseq
  %v374 = vshrl.u32 %v373, 7
  %v375 = vrot.slane %v370, 4
  %v376 = vmax.f32 %v370, %v375
  %v377 = vrot.slane %v376, 2
  %v378 = vmax.f32 %v376, %v377
  %v379 = vrot.slane %v378, 1
  %v380 = vmax.f32 %v378, %v379
  %vm381 = vcmp.eq.f32.partialorder %v370, %v380
  %v382 = vsel %vm381, %v374, 8
  %v383 = vrot.slane %v382, 4
  %vm384 = vcmp.lt.s32.totalorder %v382, %v383
  %v385 = vsel %vm384, %v382, %v383
  %v386 = vrot.slane %v385, 2
  %vm387 = vcmp.lt.s32.totalorder %v385, %v386
  %v388 = vsel %vm387, %v385, %v386
  %v389 = vrot.slane %v388, 1
  %vm390 = vcmp.lt.s32.totalorder %v388, %v389
  %v391 = vsel %vm390, %v388, %v389
  %v392 = vld [vmem:[%s1] sm:$0xff]
  %v393 = vadd.f32 %v370, %v392
  %v394 = vrot.slane %v393, 4
  %v395 = vmax.f32 %v393, %v394
  %v396 = vrot.slane %v395, 2
  %v397 = vmax.f32 %v395, %v396
  %v398 = vrot.slane %v397, 1
  %v399 = vmax.f32 %v397, %v398
  %vm400 = vcmp.eq.f32.partialorder %v393, %v399
  %v401 = vsel %vm400, %v374, 8
  %v402 = vrot.slane %v401, 4
  %vm403 = vcmp.lt.s32.totalorder %v401, %v402
  %v404 = vsel %vm403, %v401, %v402
  %v405 = vrot.slane %v404, 2
  %vm406 = vcmp.lt.s32.totalorder %v404, %v405
  %v407 = vsel %vm406, %v404, %v405
  %v408 = vrot.slane %v407, 1
  %vm409 = vcmp.lt.s32.totalorder %v407, %v408
  %v410 = vsel %vm409, %v407, %v408
  %411 = vst [vmem:[%s8] sm:$0x1] %v410
  %412 = vst [vmem:[%s9] sm:$0x1] %v391
  // Predicated region
  $region34: #{categorical_actor_forward.1} parent=0 // pred_check
    _
  $region35: #{categorical_actor_forward.1} parent=0 // pred_check_branch
    %414 = sbr.rel (0) target = $region37
  $region36: #{categorical_actor_forward.1} parent=0 // pred_region
    _
  $region37: #{categorical_actor_forward.1} parent=0 // pred_fallthru
    _
  // Predicated region
  $region38: #{categorical_actor_forward.1} parent=0 // pred_check
    _
  $region39: #{categorical_actor_forward.1} parent=0 // pred_check_branch
    %416 = sbr.rel (0) target = $region41
  $region40: #{categorical_actor_forward.1} parent=0 // pred_region
    _
  $region41: #{categorical_actor_forward.1} parent=0 // pred_fallthru
    _
  // Predicated region
  $region42: #{categorical_actor_forward.1} parent=0 // pred_check
    _
  $region43: #{categorical_actor_forward.1} parent=0 // pred_check_branch
    %418 = sbr.rel (0) target = $region45
  $region44: #{categorical_actor_forward.1} parent=0 // pred_region
    _
  $region45: #{categorical_actor_forward.1} parent=0 // pred_fallthru
    _
  // Predicated region
  $region46: #{categorical_actor_forward.1} parent=0 // pred_check
    _
  $region47: #{categorical_actor_forward.1} parent=0 // pred_check_branch
    %420 = sbr.rel (0) target = $region49
  $region48: #{categorical_actor_forward.1} parent=0 // pred_region
    _
  $region49: #{categorical_actor_forward.1} parent=0 // pred_fallthru
    _

</llo_original>
